<compile_context>
chip_gen: v7x
topology: tpu7x:2x2x1
jax: 0.10.0
libtpu: 0.0.40
codegen_flags: <defaults>
</compile_context>

<pallas_src>
import functools

import jax
import jax.numpy as jnp
from jax.experimental import pallas as pl
from jax.experimental.pallas import tpu as pltpu


def _round_up(x, m):
    return (x + m - 1) // m * m


def _pad2(a, rows, cols):
    return jnp.pad(a, ((0, rows - a.shape[0]), (0, cols - a.shape[1])))


def _qnet_duel_kernel(x_ref, w1_ref, b1_ref, wf_ref, bf_ref, out_ref, *, n_real):
    """One batch tile of the dueling head.

    x_ref  : (TILE_B, K_pad)   compute dtype (f32 or bf16)
    w1_ref : (K_pad, H_pad)    compute dtype
    b1_ref : (1, H_pad)        f32
    wf_ref : (H_pad, N_pad)    compute dtype, columns [0,n_real)=W2, n_real=w3, rest 0
    bf_ref : (1, N_pad)        f32,           columns [0,n_real)=b2, n_real=b3, rest 0
    out_ref: (TILE_B, N_pad)   f32 lane-dense slab; wrapper slices [:, :n_real]
    """
    # Layer 1: hidden = relu(x @ W1 + b1).  MXU matmul, f32 accumulation;
    # bias add / ReLU stay in f32 (v5e VPU has no bf16).
    hidden = jnp.dot(x_ref[...], w1_ref[...], preferred_element_type=jnp.float32)
    hidden = jnp.maximum(hidden + b1_ref[...], 0.0)

    # Layer 2: fused advantage+value head in a single MXU matmul.
    fused = jnp.dot(hidden.astype(wf_ref.dtype), wf_ref[...],
                    preferred_element_type=jnp.float32)
    fused = fused + bf_ref[...]

    # Column layout of `fused`: [0, n_real) advantage, n_real = value, rest pad.
    col = jax.lax.broadcasted_iota(jnp.int32, fused.shape, dimension=1)
    adv_mask = col < n_real
    adv_sum = jnp.sum(jnp.where(adv_mask, fused, 0.0), axis=-1, keepdims=True)
    adv_mean = adv_sum * (1.0 / n_real)            # mean over REAL columns only
    value = jnp.sum(jnp.where(col == n_real, fused, 0.0), axis=-1, keepdims=True)

    # qvalue = value + advantage - mean(advantage); pad/value columns are junk
    # but get sliced away in the wrapper.  Store is a full 128-lane vst.
    out_ref[...] = (value + fused - adv_mean).astype(out_ref.dtype)


def qnet_duel_forward(x, params, *, compute_dtype=jnp.float32, tile_b=None):
    """Dueling Q-net forward pass via a batched-grid Pallas kernel.

    x: (batch, input_size) float32
    params: dict with w1 (in, hid), b1 (1, hid), w2 (hid, out), b2 (1, out),
            w3 (hid, 1), b3 (1, 1)   (i.e. nn.Linear weights pre-transposed)
    compute_dtype: dtype fed to the MXU (f32 or bf16); accumulation is f32.
    """
    batch, in_size = x.shape
    hid = params["w1"].shape[1]
    out_size = params["w2"].shape[1]

    LANE, SUB = 128, 8
    k_pad = _round_up(in_size, LANE)
    h_pad = _round_up(hid, LANE)
    n_pad = _round_up(out_size + 1, LANE)          # +1 column for the value head

    # Batch tile: multiple of 8 sublanes; cap so double-buffered x/out blocks
    # stay tiny even in v7x's 64 MiB VMEM (weights stay resident).
    if tile_b is None:
        tile_b = 256 if batch >= 256 else _round_up(batch, SUB)
    tile_b = _round_up(tile_b, SUB)
    b_pad = _round_up(batch, tile_b)
    grid = (b_pad // tile_b,)

    # Pad + fuse parameters outside the kernel (zero padding keeps results exact).
    x_p = _pad2(x, b_pad, k_pad).astype(compute_dtype)
    w1_p = _pad2(params["w1"], k_pad, h_pad).astype(compute_dtype)
    b1_p = _pad2(params["b1"], 1, h_pad).astype(jnp.float32)
    w_fused = jnp.concatenate([params["w2"], params["w3"]], axis=1)   # (hid, out+1)
    b_fused = jnp.concatenate([params["b2"], params["b3"]], axis=1)   # (1, out+1)
    wf_p = _pad2(w_fused, h_pad, n_pad).astype(compute_dtype)
    bf_p = _pad2(b_fused, 1, n_pad).astype(jnp.float32)

    kernel = functools.partial(_qnet_duel_kernel, n_real=out_size)

    out_padded = pl.pallas_call(
        kernel,
        out_shape=jax.ShapeDtypeStruct((b_pad, n_pad), jnp.float32),
        grid=grid,
        in_specs=[
            pl.BlockSpec((tile_b, k_pad), lambda i: (i, 0)),   # x: tiled over batch
            pl.BlockSpec((k_pad, h_pad), lambda i: (0, 0)),    # W1: VMEM-resident
            pl.BlockSpec((1, h_pad), lambda i: (0, 0)),        # b1: VMEM-resident
            pl.BlockSpec((h_pad, n_pad), lambda i: (0, 0)),    # W_fused: resident
            pl.BlockSpec((1, n_pad), lambda i: (0, 0)),        # b_fused: resident
        ],
        out_specs=pl.BlockSpec((tile_b, n_pad), lambda i: (i, 0)),
        compiler_params=pltpu.CompilerParams(
            dimension_semantics=("parallel",),                 # shards across v7x TCs
        ),
    )(x_p, w1_p, b1_p, wf_p, bf_p)

    return out_padded[:batch, :out_size]


def init_params(key, input_size, hidden_size, output_size):
    """Deterministic synthetic parameters (mirrors nn.Linear shapes, transposed)."""
    k1, k2, k3, k4, k5, k6 = jax.random.split(key, 6)
    s1 = 1.0 / jnp.sqrt(input_size)
    s2 = 1.0 / jnp.sqrt(hidden_size)
    return {
        # nn.Linear(input_size, hidden_size): weight (hid, in) -> stored (in, hid)
        "w1": jax.random.uniform(k1, (input_size, hidden_size), jnp.float32, -s1, s1),
        "b1": jax.random.uniform(k2, (1, hidden_size), jnp.float32, -s1, s1),
        # nn.Linear(hidden_size, output_size)
        "w2": jax.random.uniform(k3, (hidden_size, output_size), jnp.float32, -s2, s2),
        "b2": jax.random.uniform(k4, (1, output_size), jnp.float32, -s2, s2),
        # nn.Linear(hidden_size, 1)
        "w3": jax.random.uniform(k5, (hidden_size, 1), jnp.float32, -s2, s2),
        "b3": jax.random.uniform(k6, (1, 1), jnp.float32, -s2, s2),
    }


def qnet_duel_reference(x, p):
    hidden = jnp.maximum(x @ p["w1"] + p["b1"], 0.0)
    advantage = hidden @ p["w2"] + p["b2"]
    value = hidden @ p["w3"] + p["b3"]
    return value + advantage - jnp.mean(advantage, axis=-1, keepdims=True)


if __name__ == "__main__":
    input_size, hidden_size, output_size = 16, 32, 8
    batch = 2

    key = jax.random.PRNGKey(0)
    kx, kp = jax.random.split(key)
    x = jax.random.normal(kx, (batch, input_size), jnp.float32)
    params = init_params(kp, input_size, hidden_size, output_size)

    q_ref = qnet_duel_reference(x, params)

    # f32 MXU path: must match the reference tightly.
    q = qnet_duel_forward(x, params, compute_dtype=jnp.float32)
    jax.block_until_ready(q)
    assert q.shape == (batch, output_size)
    assert jnp.allclose(q, q_ref, atol=1e-5, rtol=1e-5)

    # bf16 MXU path (f32 accumulation / elementwise): relaxed tolerance.
    q_bf16 = qnet_duel_forward(x, params, compute_dtype=jnp.bfloat16)
    jax.block_until_ready(q_bf16)
    assert q_bf16.shape == (batch, output_size)
    assert jnp.allclose(q_bf16, q_ref, atol=5e-2, rtol=5e-2)

    print("KERNEL_OK")
</pallas_src>

<mosaic_0001>
module attributes {stable_mosaic.version = 11 : i64} {
  func.func @_qnet_duel_kernel(%arg0: i32, %arg1: memref<8x128xf32, #tpu.memory_space<vmem>>, %arg2: memref<128x128xf32, #tpu.memory_space<vmem>>, %arg3: memref<1x128xf32, #tpu.memory_space<vmem>>, %arg4: memref<128x128xf32, #tpu.memory_space<vmem>>, %arg5: memref<1x128xf32, #tpu.memory_space<vmem>>, %arg6: memref<8x128xf32, #tpu.memory_space<vmem>>) attributes {dimension_semantics = [#tpu.dimension_semantics<parallel>], iteration_bounds = array<i64: 1>, scalar_prefetch = 0 : i64, scratch_operands = 0 : i64, tpu.core_type = #tpu.core_type<tc>, window_params = [{transform_indices = @transform_0, window_bounds = array<i64: 8, 128>}, {pipeline_mode = #tpu.pipeline_mode<synchronous>, transform_indices = @transform_1, window_bounds = array<i64: 128, 128>}, {pipeline_mode = #tpu.pipeline_mode<synchronous>, transform_indices = @transform_2, window_bounds = array<i64: 1, 128>}, {pipeline_mode = #tpu.pipeline_mode<synchronous>, transform_indices = @transform_3, window_bounds = array<i64: 128, 128>}, {pipeline_mode = #tpu.pipeline_mode<synchronous>, transform_indices = @transform_4, window_bounds = array<i64: 1, 128>}, {transform_indices = @transform_5, window_bounds = array<i64: 8, 128>}]} {
    %c0 = arith.constant 0 : index
    %c0_0 = arith.constant 0 : index
    %0 = vector.load %arg1[%c0, %c0_0] : memref<8x128xf32, #tpu.memory_space<vmem>>, vector<8x128xf32>
    %c0_1 = arith.constant 0 : index
    %c0_2 = arith.constant 0 : index
    %1 = vector.load %arg2[%c0_1, %c0_2] : memref<128x128xf32, #tpu.memory_space<vmem>>, vector<128x128xf32>
    %cst = arith.constant dense<0.000000e+00> : vector<8x128xf32>
    %2 = tpu.matmul %0, %1, %cst {dimension_numbers = #tpu.dot_dimension_numbers<[1], [0], [0], [1], [0, 0, 1, 1], [], []>} : vector<8x128xf32>, vector<128x128xf32>, vector<8x128xf32> -> vector<8x128xf32>
    %c0_3 = arith.constant 0 : index
    %c0_4 = arith.constant 0 : index
    %3 = vector.load %arg3[%c0_3, %c0_4] : memref<1x128xf32, #tpu.memory_space<vmem>>, vector<1x128xf32>
    %4 = vector.broadcast %3 : vector<1x128xf32> to vector<8x128xf32>
    %5 = arith.addf %2, %4 : vector<8x128xf32>
    %cst_5 = arith.constant 0.000000e+00 : f32
    %6 = vector.broadcast %cst_5 : f32 to vector<8x128xf32>
    %7 = arith.maximumf %5, %6 : vector<8x128xf32>
    %c0_6 = arith.constant 0 : index
    %c0_7 = arith.constant 0 : index
    %8 = vector.load %arg4[%c0_6, %c0_7] : memref<128x128xf32, #tpu.memory_space<vmem>>, vector<128x128xf32>
    %cst_8 = arith.constant dense<0.000000e+00> : vector<8x128xf32>
    %9 = tpu.matmul %7, %8, %cst_8 {dimension_numbers = #tpu.dot_dimension_numbers<[1], [0], [0], [1], [0, 0, 1, 1], [], []>} : vector<8x128xf32>, vector<128x128xf32>, vector<8x128xf32> -> vector<8x128xf32>
    %c0_9 = arith.constant 0 : index
    %c0_10 = arith.constant 0 : index
    %10 = vector.load %arg5[%c0_9, %c0_10] : memref<1x128xf32, #tpu.memory_space<vmem>>, vector<1x128xf32>
    %11 = vector.broadcast %10 : vector<1x128xf32> to vector<8x128xf32>
    %12 = arith.addf %9, %11 : vector<8x128xf32>
    %13 = tpu.iota {dimensions = array<i32: 1>} : vector<8x128xi32>
    %c8_i32 = arith.constant 8 : i32
    %14 = vector.broadcast %c8_i32 : i32 to vector<8x128xi32>
    %15 = arith.cmpi slt, %13, %14 : vector<8x128xi32>
    %cst_11 = arith.constant 0.000000e+00 : f32
    %16 = vector.broadcast %cst_11 : f32 to vector<8x128xf32>
    %17 = arith.select %15, %12, %16 : vector<8x128xi1>, vector<8x128xf32>
    %cst_12 = arith.constant dense<0.000000e+00> : vector<8xf32>
    %18 = vector.multi_reduction <add>, %17, %cst_12 [1] : vector<8x128xf32> to vector<8xf32>
    %19 = vector.shape_cast %18 : vector<8xf32> to vector<8x1xf32>
    %cst_13 = arith.constant 1.250000e-01 : f32
    %20 = vector.broadcast %cst_13 : f32 to vector<8x1xf32>
    %21 = arith.mulf %19, %20 : vector<8x1xf32>
    %c8_i32_14 = arith.constant 8 : i32
    %22 = vector.broadcast %c8_i32_14 : i32 to vector<8x128xi32>
    %23 = arith.cmpi eq, %13, %22 : vector<8x128xi32>
    %cst_15 = arith.constant 0.000000e+00 : f32
    %24 = vector.broadcast %cst_15 : f32 to vector<8x128xf32>
    %25 = arith.select %23, %12, %24 : vector<8x128xi1>, vector<8x128xf32>
    %cst_16 = arith.constant dense<0.000000e+00> : vector<8xf32>
    %26 = vector.multi_reduction <add>, %25, %cst_16 [1] : vector<8x128xf32> to vector<8xf32>
    %27 = vector.shape_cast %26 : vector<8xf32> to vector<8x1xf32>
    %28 = vector.broadcast %27 : vector<8x1xf32> to vector<8x128xf32>
    %29 = arith.addf %28, %12 : vector<8x128xf32>
    %30 = vector.broadcast %21 : vector<8x1xf32> to vector<8x128xf32>
    %31 = arith.subf %29, %30 : vector<8x128xf32>
    %c0_17 = arith.constant 0 : index
    %c0_18 = arith.constant 0 : index
    %32 = vector.load %arg6[%c0_17, %c0_18] : memref<8x128xf32, #tpu.memory_space<vmem>>, vector<8x128xf32>
    tpu.vector_store %arg6[%c0_17, %c0_18], %31 {strides = array<i32>} : memref<8x128xf32, #tpu.memory_space<vmem>>, vector<8x128xf32>,
    return
  }
  func.func @transform_0(%arg0: i32) -> (i32, i32) {
    %c0_i32 = arith.constant 0 : i32
    %c0_i32_0 = arith.constant 0 : i32
    return %arg0, %c0_i32 : i32, i32
  }
  func.func @transform_1(%arg0: i32) -> (i32, i32) {
    %c0_i32 = arith.constant 0 : i32
    %c0_i32_0 = arith.constant 0 : i32
    %c0_i32_1 = arith.constant 0 : i32
    return %c0_i32, %c0_i32_0 : i32, i32
  }
  func.func @transform_2(%arg0: i32) -> (i32, i32) {
    %c0_i32 = arith.constant 0 : i32
    %c0_i32_0 = arith.constant 0 : i32
    %c0_i32_1 = arith.constant 0 : i32
    return %c0_i32, %c0_i32_0 : i32, i32
  }
  func.func @transform_3(%arg0: i32) -> (i32, i32) {
    %c0_i32 = arith.constant 0 : i32
    %c0_i32_0 = arith.constant 0 : i32
    %c0_i32_1 = arith.constant 0 : i32
    return %c0_i32, %c0_i32_0 : i32, i32
  }
  func.func @transform_4(%arg0: i32) -> (i32, i32) {
    %c0_i32 = arith.constant 0 : i32
    %c0_i32_0 = arith.constant 0 : i32
    %c0_i32_1 = arith.constant 0 : i32
    return %c0_i32, %c0_i32_0 : i32, i32
  }
  func.func @transform_5(%arg0: i32) -> (i32, i32) {
    %c0_i32 = arith.constant 0 : i32
    %c0_i32_0 = arith.constant 0 : i32
    return %arg0, %c0_i32 : i32, i32
  }
}

</mosaic_0001>

<llo_original>
// kernel: tpu_custom_call.1
$region0: #{tpu_custom_call.1}
  #allocation0 [shape = 'u32[]', space=smem, size = 0x4, offset = 0x4, fixed_abs, tag = 'smem constant byte address 0x4 - core index']
  #allocation1 [shape = 'u32[144,128]{1,0:T(1,128)}', space=vmem, size = 0x12000, scoped, tag = 'internal scratch']
  %s0 = inlined_call_operand.hbm [shape: f32[8,128], index: 0, kind: input, shape index: {}]
  %s1 = inlined_call_operand.hbm [shape: f32[128,128], index: 1, kind: input, shape index: {}]
  %s2 = inlined_call_operand.vmem [shape: f32[1,128], index: 2, kind: input, shape index: {}]
  %s3 = inlined_call_operand.hbm [shape: f32[128,128], index: 3, kind: input, shape index: {}]
  %s4 = inlined_call_operand.vmem [shape: f32[1,128], index: 4, kind: input, shape index: {}]
  %s5 = inlined_call_operand.hbm [shape: f32[8,128], index: 5, kind: output, shape index: {}]
  %s6 = sld [smem:[#allocation0]]
  $region42: #{tpu_custom_call.1} parent=0
    _
  %s8 = ssub.s32 1, %s6
  %s9 = scalar_select 0, %s8, %s6
  $region1: #{tpu_custom_call.1} parent=0
    #allocation2 [shape = 'u8[4096]{0}', space=vmem, size = 0x1000, scoped, tag = 'input window, operand 0, single buffered']
    #allocation3 [shape = 's32[1]{0}', space=sflag, size = 0x4, scoped, tag = 'scoped memory for tpu_custom_call.1']
    #allocation4 [shape = 's32[1]{0}', space=sflag, size = 0x4, scoped, tag = 'scoped memory for tpu_custom_call.1']
    #allocation5 [shape = 'u8[65536]{0}', space=vmem, size = 0x10000, scoped, tag = 'input window, operand 1, single buffered']
    #allocation6 [shape = 's32[1]{0}', space=sflag, size = 0x4, scoped, tag = 'scoped memory for tpu_custom_call.1']
    #allocation7 [shape = 'u8[65536]{0}', space=vmem, size = 0x10000, scoped, tag = 'input window, operand 3, single buffered']
    #allocation8 [shape = 'u8[4096]{0}', space=vmem, size = 0x1000, scoped, tag = 'output window, operand 0, single buffered']
    %10 = vsyncpa [#allocation3], 0
    %11 = vsyncpa [#allocation6], 0
    %12 = vsyncpa [#allocation4], 0
    // Predicated region
    $region2: #{tpu_custom_call.1} parent=1 // pred_check
      _
    $region3: #{tpu_custom_call.1} parent=1 // pred_check_branch
      %14 = sbr.rel (0) target = $region5
    $region4: #{tpu_custom_call.1} parent=1 // pred_region
      %s16 = ssub.s32 128, 128
      %17 = vsyncadd [#allocation3], %s16
      %s19 = sshll.u32 [#allocation2], 4
      %s20 = int_to_ptr.vmem [resolvable:$true] %s19
      %22 = dma.hbm_to_vmem [thread:$0]  %s0, 128, %s20, [#allocation3]
    $region5: #{tpu_custom_call.1} parent=1 // pred_fallthru
      _
    // Predicated region
    $region6: #{tpu_custom_call.1} parent=1 // pred_check
      _
    $region7: #{tpu_custom_call.1} parent=1 // pred_check_branch
      %24 = sbr.rel (0) target = $region9
    $region8: #{tpu_custom_call.1} parent=1 // pred_region
      %s26 = ssub.s32 2048, 2048
      %27 = vsyncadd [#allocation6], %s26
      %s28 = sshll.u32 [#allocation5], 4
      %s29 = int_to_ptr.vmem [resolvable:$true] %s28
      %34 = dma.hbm_to_vmem [thread:$0]  %s1, 2048, %s29, [#allocation6], 128, 128, 8
    $region9: #{tpu_custom_call.1} parent=1 // pred_fallthru
      _
    // Predicated region
    $region10: #{tpu_custom_call.1} parent=1 // pred_check
      _
    $region11: #{tpu_custom_call.1} parent=1 // pred_check_branch
      %36 = sbr.rel (0) target = $region13
    $region12: #{tpu_custom_call.1} parent=1 // pred_region
      _
    $region13: #{tpu_custom_call.1} parent=1 // pred_fallthru
      _
    // Predicated region
    $region14: #{tpu_custom_call.1} parent=1 // pred_check
      _
    $region15: #{tpu_custom_call.1} parent=1 // pred_check_branch
      %38 = sbr.rel (0) target = $region17
    $region16: #{tpu_custom_call.1} parent=1 // pred_region
      %s40 = ssub.s32 2048, 2048
      %41 = vsyncadd [#allocation6], %s40
      %s42 = sshll.u32 [#allocation7], 4
      %s43 = int_to_ptr.vmem [resolvable:$true] %s42
      %48 = dma.hbm_to_vmem [thread:$0]  %s3, 2048, %s43, [#allocation6], 128, 128, 8
    $region17: #{tpu_custom_call.1} parent=1 // pred_fallthru
      _
    // Predicated region
    $region18: #{tpu_custom_call.1} parent=1 // pred_check
      _
    $region19: #{tpu_custom_call.1} parent=1 // pred_check_branch
      %50 = sbr.rel (0) target = $region21
    $region20: #{tpu_custom_call.1} parent=1 // pred_region
      _
    $region21: #{tpu_custom_call.1} parent=1 // pred_fallthru
      _
    // Predicated region
    $region22: #{tpu_custom_call.1} parent=1 // pred_check
      _
    $region23: #{tpu_custom_call.1} parent=1 // pred_check_branch
      %52 = sbr.rel (0) target = $region25
    $region24: #{tpu_custom_call.1} parent=1 // pred_region
      %53 = dma.done [#allocation3], 128
    $region25: #{tpu_custom_call.1} parent=1 // pred_fallthru
      _
    // Predicated region
    $region26: #{tpu_custom_call.1} parent=1 // pred_check
      _
    $region27: #{tpu_custom_call.1} parent=1 // pred_check_branch
      %55 = sbr.rel (0) target = $region29
    $region28: #{tpu_custom_call.1} parent=1 // pred_region
      %56 = dma.done [#allocation6], 2048
    $region29: #{tpu_custom_call.1} parent=1 // pred_fallthru
      _
    // Predicated region
    $region30: #{tpu_custom_call.1} parent=1 // pred_check
      _
    $region31: #{tpu_custom_call.1} parent=1 // pred_check_branch
      %58 = sbr.rel (0) target = $region33
    $region32: #{tpu_custom_call.1} parent=1 // pred_region
      %59 = dma.done [#allocation6], 2048
    $region33: #{tpu_custom_call.1} parent=1 // pred_fallthru
      _
    %v60 = vld [vmem:[#allocation2] sm:$0xff]
    %v61 = vld [vmem:[#allocation5] sm:$0xff]
    %v62 = vld [vmem:[#allocation5 + $0x8] sm:$0xff]
    %v63 = vld [vmem:[#allocation5 + $0x10] sm:$0xff]
    %v64 = vld [vmem:[#allocation5 + $0x18] sm:$0xff]
    %v65 = vld [vmem:[#allocation5 + $0x20] sm:$0xff]
    %v66 = vld [vmem:[#allocation5 + $0x28] sm:$0xff]
    %v67 = vld [vmem:[#allocation5 + $0x30] sm:$0xff]
    %v68 = vld [vmem:[#allocation5 + $0x38] sm:$0xff]
    %v69 = vld [vmem:[#allocation5 + $0x40] sm:$0xff]
    %v70 = vld [vmem:[#allocation5 + $0x48] sm:$0xff]
    %v71 = vld [vmem:[#allocation5 + $0x50] sm:$0xff]
    %v72 = vld [vmem:[#allocation5 + $0x58] sm:$0xff]
    %v73 = vld [vmem:[#allocation5 + $0x60] sm:$0xff]
    %v74 = vld [vmem:[#allocation5 + $0x68] sm:$0xff]
    %v75 = vld [vmem:[#allocation5 + $0x70] sm:$0xff]
    %v76 = vld [vmem:[#allocation5 + $0x78] sm:$0xff]
    %v77 = vld [vmem:[%s2] sm:$0x1]
    %v79 = vlaneseq
    %v80 = vshrl.u32 %v79, 7
    %v81 = vsub.s32 0, %v80
    %v82 = vrot.slane %v77, %v81
    %84 = vmatprep.subr.mxu0 0.0
    %85 = vmatpush1.msra.mxu0 %v61
    %86 = vmatprep.subr.mxu0 0.0
    %87 = vmatpush1.msra.mxu0 %v62
    %88 = vmatprep.subr.mxu0 0.0
    %89 = vmatpush1.msra.mxu0 %v63
    %90 = vmatprep.subr.mxu0 0.0
    %91 = vmatpush1.msra.mxu0 %v64
    %92 = vmatprep.subr.mxu0 0.0
    %93 = vmatpush1.msra.mxu0 %v65
    %94 = vmatprep.subr.mxu0 0.0
    %95 = vmatpush1.msra.mxu0 %v66
    %96 = vmatprep.subr.mxu0 0.0
    %97 = vmatpush1.msra.mxu0 %v67
    %98 = vmatprep.subr.mxu0 0.0
    %99 = vmatpush1.msra.mxu0 %v68
    %100 = vmatprep.subr.mxu0 0.0
    %101 = vmatpush1.msra.mxu0 %v69
    %102 = vmatprep.subr.mxu0 0.0
    %103 = vmatpush1.msra.mxu0 %v70
    %104 = vmatprep.subr.mxu0 0.0
    %105 = vmatpush1.msra.mxu0 %v71
    %106 = vmatprep.subr.mxu0 0.0
    %107 = vmatpush1.msra.mxu0 %v72
    %108 = vmatprep.subr.mxu0 0.0
    %109 = vmatpush1.msra.mxu0 %v73
    %110 = vmatprep.subr.mxu0 0.0
    %111 = vmatpush1.msra.mxu0 %v74
    %112 = vmatprep.subr.mxu0 0.0
    %113 = vmatpush1.msra.mxu0 %v75
    %114 = vmatprep.subr.mxu0 0.0
    %115 = vmatpush1.msra.mxu0 %v76
    %116 = vmatprep.subr.mxu0 0.0
    %117 = vmatpush1.msra.mxu0 0.0
    %118 = vmatprep.subr.mxu0 0.0
    %119 = vmatpush1.msra.mxu0 0.0
    %120 = vmatprep.subr.mxu0 0.0
    %121 = vmatpush1.msra.mxu0 0.0
    %122 = vmatprep.subr.mxu0 0.0
    %123 = vmatpush1.msra.mxu0 0.0
    %124 = vmatprep.subr.mxu0 0.0
    %125 = vmatpush1.msra.mxu0 0.0
    %126 = vmatprep.subr.mxu0 0.0
    %127 = vmatpush1.msra.mxu0 0.0
    %128 = vmatprep.subr.mxu0 0.0
    %129 = vmatpush1.msra.mxu0 0.0
    %130 = vmatprep.subr.mxu0 0.0
    %131 = vmatpush1.msra.mxu0 0.0
    %132 = vmatprep.subr.mxu0 0.0
    %133 = vmatpush1.msra.mxu0 0.0
    %134 = vmatprep.subr.mxu0 0.0
    %135 = vmatpush1.msra.mxu0 0.0
    %136 = vmatprep.subr.mxu0 0.0
    %137 = vmatpush1.msra.mxu0 0.0
    %138 = vmatprep.subr.mxu0 0.0
    %139 = vmatpush1.msra.mxu0 0.0
    %140 = vmatprep.subr.mxu0 0.0
    %141 = vmatpush1.msra.mxu0 0.0
    %142 = vmatprep.subr.mxu0 0.0
    %143 = vmatpush1.msra.mxu0 0.0
    %144 = vmatprep.subr.mxu0 0.0
    %145 = vmatpush1.msra.mxu0 0.0
    %146 = vmatprep.subr.mxu0 0.0
    %147 = vmatpush1.msra.mxu0 0.0
    %148 = vmatprep.mubr.f32.mxu0 0.0
    %149 = vmatmul.mubr.f32.gmra.mrb[0].mxu0 %v60
    %v150 = vpop.f32.mrb[0].mxu0
    %v151 = vadd.f32 %v82, %v150
    %v152 = vpop.f32.mrb[0].mxu0
    %153 = vdwg.mxu0
    %v154 = vmax.f32 %v151, 0.0
    %v155 = vld [vmem:[#allocation7] sm:$0xff]
    %v156 = vld [vmem:[#allocation7 + $0x8] sm:$0xff]
    %v157 = vld [vmem:[#allocation7 + $0x10] sm:$0xff]
    %v158 = vld [vmem:[#allocation7 + $0x18] sm:$0xff]
    %v159 = vld [vmem:[#allocation7 + $0x20] sm:$0xff]
    %v160 = vld [vmem:[#allocation7 + $0x28] sm:$0xff]
    %v161 = vld [vmem:[#allocation7 + $0x30] sm:$0xff]
    %v162 = vld [vmem:[#allocation7 + $0x38] sm:$0xff]
    %v163 = vld [vmem:[#allocation7 + $0x40] sm:$0xff]
    %v164 = vld [vmem:[#allocation7 + $0x48] sm:$0xff]
    %v165 = vld [vmem:[#allocation7 + $0x50] sm:$0xff]
    %v166 = vld [vmem:[#allocation7 + $0x58] sm:$0xff]
    %v167 = vld [vmem:[#allocation7 + $0x60] sm:$0xff]
    %v168 = vld [vmem:[#allocation7 + $0x68] sm:$0xff]
    %v169 = vld [vmem:[#allocation7 + $0x70] sm:$0xff]
    %v170 = vld [vmem:[#allocation7 + $0x78] sm:$0xff]
    %v171 = vld [vmem:[%s4] sm:$0x1]
    %v173 = vlaneseq
    %v174 = vshrl.u32 %v173, 7
    %v175 = vsub.s32 0, %v174
    %v176 = vrot.slane %v171, %v175
    %178 = vmatprep.subr.mxu0 0.0
    %179 = vmatpush1.msra.mxu0 %v155
    %180 = vmatprep.subr.mxu0 0.0
    %181 = vmatpush1.msra.mxu0 %v156
    %182 = vmatprep.subr.mxu0 0.0
    %183 = vmatpush1.msra.mxu0 %v157
    %184 = vmatprep.subr.mxu0 0.0
    %185 = vmatpush1.msra.mxu0 %v158
    %186 = vmatprep.subr.mxu0 0.0
    %187 = vmatpush1.msra.mxu0 %v159
    %188 = vmatprep.subr.mxu0 0.0
    %189 = vmatpush1.msra.mxu0 %v160
    %190 = vmatprep.subr.mxu0 0.0
    %191 = vmatpush1.msra.mxu0 %v161
    %192 = vmatprep.subr.mxu0 0.0
    %193 = vmatpush1.msra.mxu0 %v162
    %194 = vmatprep.subr.mxu0 0.0
    %195 = vmatpush1.msra.mxu0 %v163
    %196 = vmatprep.subr.mxu0 0.0
    %197 = vmatpush1.msra.mxu0 %v164
    %198 = vmatprep.subr.mxu0 0.0
    %199 = vmatpush1.msra.mxu0 %v165
    %200 = vmatprep.subr.mxu0 0.0
    %201 = vmatpush1.msra.mxu0 %v166
    %202 = vmatprep.subr.mxu0 0.0
    %203 = vmatpush1.msra.mxu0 %v167
    %204 = vmatprep.subr.mxu0 0.0
    %205 = vmatpush1.msra.mxu0 %v168
    %206 = vmatprep.subr.mxu0 0.0
    %207 = vmatpush1.msra.mxu0 %v169
    %208 = vmatprep.subr.mxu0 0.0
    %209 = vmatpush1.msra.mxu0 %v170
    %210 = vmatprep.subr.mxu0 0.0
    %211 = vmatpush1.msra.mxu0 0.0
    %212 = vmatprep.subr.mxu0 0.0
    %213 = vmatpush1.msra.mxu0 0.0
    %214 = vmatprep.subr.mxu0 0.0
    %215 = vmatpush1.msra.mxu0 0.0
    %216 = vmatprep.subr.mxu0 0.0
    %217 = vmatpush1.msra.mxu0 0.0
    %218 = vmatprep.subr.mxu0 0.0
    %219 = vmatpush1.msra.mxu0 0.0
    %220 = vmatprep.subr.mxu0 0.0
    %221 = vmatpush1.msra.mxu0 0.0
    %222 = vmatprep.subr.mxu0 0.0
    %223 = vmatpush1.msra.mxu0 0.0
    %224 = vmatprep.subr.mxu0 0.0
    %225 = vmatpush1.msra.mxu0 0.0
    %226 = vmatprep.subr.mxu0 0.0
    %227 = vmatpush1.msra.mxu0 0.0
    %228 = vmatprep.subr.mxu0 0.0
    %229 = vmatpush1.msra.mxu0 0.0
    %230 = vmatprep.subr.mxu0 0.0
    %231 = vmatpush1.msra.mxu0 0.0
    %232 = vmatprep.subr.mxu0 0.0
    %233 = vmatpush1.msra.mxu0 0.0
    %234 = vmatprep.subr.mxu0 0.0
    %235 = vmatpush1.msra.mxu0 0.0
    %236 = vmatprep.subr.mxu0 0.0
    %237 = vmatpush1.msra.mxu0 0.0
    %238 = vmatprep.subr.mxu0 0.0
    %239 = vmatpush1.msra.mxu0 0.0
    %240 = vmatprep.subr.mxu0 0.0
    %241 = vmatpush1.msra.mxu0 0.0
    %242 = vmatprep.mubr.f32.mxu0 0.0
    %243 = vmatmul.mubr.f32.gmra.mrb[0].mxu0 %v154
    %v244 = vpop.f32.mrb[0].mxu0
    %v245 = vadd.f32 %v176, %v244
    %v246 = vpop.f32.mrb[0].mxu0
    %247 = vdwg.mxu0
    %v248 = vlaneseq
    %v249 = vand.u32 %v248, 127
    %vm250 = vcmp.lt.s32.totalorder %v249, 8
    %v251 = vsel %vm250, %v245, 0.0
    %252 = vadd.xlane.f32.xlu0 %v251
    %v253 = vpop.xlane.xlu0 %252
    %v254 = vmul.f32 %v253, 0.125
    %vm255 = vcmp.eq.s32.totalorder %v249, 8
    %v256 = vsel %vm255, %v245, 0.0
    %257 = vadd.xlane.f32.xlu0 %v256
    %v258 = vpop.xlane.xlu0 %257
    %v259 = vadd.f32 %v258, %v245
    %v260 = vsub.f32 %v259, %v254
    %261 = vst [vmem:[#allocation8] sm:$0xff] %v260
    // Predicated region
    $region34: #{tpu_custom_call.1} parent=1 // pred_check
      _
    $region35: #{tpu_custom_call.1} parent=1 // pred_check_branch
      %263 = sbr.rel (0) target = $region37
    $region36: #{tpu_custom_call.1} parent=1 // pred_region
      %s265 = ssub.s32 128, 128
      %266 = vsyncadd [#allocation4], %s265
      %s268 = sshll.u32 [#allocation8], 4
      %s269 = int_to_ptr.vmem [resolvable:$true] %s268
      %271 = dma.vmem_to_hbm [thread:$0]  %s269, 128, %s5, [#allocation4]
    $region37: #{tpu_custom_call.1} parent=1 // pred_fallthru
      _
    // Predicated region
    $region38: #{tpu_custom_call.1} parent=1 // pred_check
      _
    $region39: #{tpu_custom_call.1} parent=1 // pred_check_branch
      %273 = sbr.rel (0) target = $region41
    $region40: #{tpu_custom_call.1} parent=1 // pred_region
      %274 = dma.done [#allocation4], 128
    $region41: #{tpu_custom_call.1} parent=1 // pred_fallthru
      _
    %275 = vsyncpa [#allocation3], 1
    %276 = vsyncpa [#allocation6], 1
    %277 = vsyncpa [#allocation4], 1

</llo_original>
